<compile_context>
chip_gen: v7x
topology: tpu7x:2x2x1
jax: 0.10.0
libtpu: 0.0.40
codegen_flags: <defaults>
</compile_context>

<pallas_src>
import jax
import jax.numpy as jnp
import numpy as np
from jax.experimental import pallas as pl
from jax.experimental.pallas import tpu as pltpu


def _fine_heatmap_b_kernel(p_ref, c_ref, lab_ref, out_ref):
    """Single invocation over all landmarks.

    p_ref   : VMEM (L, S)     -- heatmap logits, S = B*H*W (lane-dense)
    c_ref   : VMEM (D, L, S)  -- coordinates, coord-dim outermost
    lab_ref : VMEM (D, L, 1)  -- labels[0] relayouted, broadcast over lanes
    out_ref : SMEM (1, 1)     -- total loss
    """
    d_dim = c_ref.shape[0]

    sig = jax.nn.sigmoid(p_ref[...]) + 1e-10              # (L, S) f32
    denom = jnp.sum(sig, axis=-1, keepdims=True)          # (L, 1)

    sumabs = jnp.zeros_like(sig)
    for d in range(d_dim):                                # D is tiny -> unrolled
        sumabs = sumabs + jnp.abs(c_ref[d] - lab_ref[d])  # (L,S) - (L,1) bcast

    numer = jnp.sum(sig * sumabs, axis=-1, keepdims=True)  # (L, 1)
    out_ref[0, 0] = jnp.sum(numer / denom)                 # scalar total loss


def fine_heatmap_b_loss(predicted_heatmap, coordinate, labels):
    """predicted_heatmap: (L, B, H, W) f32 logits
       coordinate:        (L, B, H, W, D) f32
       labels:            (1, L, D) f32
       returns scalar loss (f32)."""
    L, B, H, W = predicted_heatmap.shape
    D = coordinate.shape[-1]
    S = B * H * W

    # Lane-dense relayouts (single copy each; p's reshape is free).
    p = predicted_heatmap.reshape(L, S).astype(jnp.float32)                      # (L, S)
    c = jnp.transpose(coordinate, (4, 0, 1, 2, 3)).reshape(D, L, S).astype(jnp.float32)  # (D, L, S)
    lab = jnp.transpose(labels[0], (1, 0)).reshape(D, L, 1).astype(jnp.float32)  # (D, L, 1)

    out = pl.pallas_call(
        _fine_heatmap_b_kernel,
        out_shape=jax.ShapeDtypeStruct((1, 1), jnp.float32),
        in_specs=[
            pl.BlockSpec(memory_space=pltpu.MemorySpace.VMEM),   # heatmap logits
            pl.BlockSpec(memory_space=pltpu.MemorySpace.VMEM),   # coordinates
            pl.BlockSpec(memory_space=pltpu.MemorySpace.VMEM),   # labels
        ],
        out_specs=pl.BlockSpec(memory_space=pltpu.MemorySpace.SMEM),
    )(p, c, lab)

    return out[0, 0]


def _reference_loss(p, c, lab):
    """Pure-JAX transcription of the PyTorch forward, for verification."""
    L = p.shape[0]
    loss = jnp.float32(0.0)
    for i in range(L):
        h = jax.nn.sigmoid(p[i]) + 1e-10
        h = h / h.sum()
        diff = jnp.abs(c[i] - lab[0, i, :])              # (B,H,W,D)
        diff = jnp.transpose(diff, (3, 0, 1, 2))         # (D,B,H,W)
        loss = loss + (diff * h).sum()
    return loss


if __name__ == "__main__":
    # Small shapes implied by the module: landmarkNum=4, batch=2, crop 16x16,
    # coordinate dim D=2 (x,y grids per landmark). ROIs_b/size_tensor/phase are
    # unused by the forward pass and therefore omitted.
    L, B, H, W, D = 4, 2, 16, 16, 2

    key = jax.random.PRNGKey(0)
    k1, k2, k3 = jax.random.split(key, 3)
    predicted_heatmap = jax.random.normal(k1, (L, B, H, W), dtype=jnp.float32)
    coordinate = jax.random.uniform(k2, (L, B, H, W, D), dtype=jnp.float32) * 16.0
    labels = jax.random.uniform(k3, (1, L, D), dtype=jnp.float32) * 16.0

    loss = fine_heatmap_b_loss(predicted_heatmap, coordinate, labels)
    loss = jax.block_until_ready(loss)

    ref = jax.block_until_ready(_reference_loss(predicted_heatmap, coordinate, labels))
    assert np.allclose(np.asarray(loss), np.asarray(ref), rtol=1e-4, atol=1e-4), (loss, ref)

    print("KERNEL_OK")
</pallas_src>

<mosaic_0001>
module attributes {stable_mosaic.version = 11 : i64} {
  func.func @_fine_heatmap_b_kernel(%arg0: memref<4x512xf32, #tpu.memory_space<vmem>>, %arg1: memref<2x4x512xf32, #tpu.memory_space<vmem>>, %arg2: memref<2x4x1xf32, #tpu.memory_space<vmem>>, %arg3: memref<1x1xf32, #tpu.memory_space<smem>>) attributes {dimension_semantics = [], scalar_prefetch = 0 : i64, scratch_operands = 0 : i64, tpu.core_type = #tpu.core_type<tc>} {
    %c0 = arith.constant 0 : index
    %c0_0 = arith.constant 0 : index
    %0 = vector.load %arg0[%c0, %c0_0] : memref<4x512xf32, #tpu.memory_space<vmem>>, vector<4x512xf32>
    %1 = arith.negf %0 : vector<4x512xf32>
    %2 = math.exp %1 : vector<4x512xf32>
    %cst = arith.constant 1.000000e+00 : f32
    %3 = vector.broadcast %cst : f32 to vector<4x512xf32>
    %4 = arith.addf %3, %2 : vector<4x512xf32>
    %5 = arith.divf %3, %4 : vector<4x512xf32>
    %cst_1 = arith.constant 1.000000e-10 : f32
    %6 = vector.broadcast %cst_1 : f32 to vector<4x512xf32>
    %7 = arith.addf %5, %6 : vector<4x512xf32>
    %cst_2 = arith.constant dense<0.000000e+00> : vector<4xf32>
    %8 = vector.multi_reduction <add>, %7, %cst_2 [1] : vector<4x512xf32> to vector<4xf32>
    %9 = vector.shape_cast %8 : vector<4xf32> to vector<4x1xf32>
    %cst_3 = arith.constant 0.000000e+00 : f32
    %10 = vector.broadcast %cst_3 : f32 to vector<4x512xf32>
    %c0_4 = arith.constant 0 : index
    %c0_5 = arith.constant 0 : index
    %c0_6 = arith.constant 0 : index
    %11 = vector.load %arg1[%c0_4, %c0_5, %c0_6] : memref<2x4x512xf32, #tpu.memory_space<vmem>>, vector<1x4x512xf32>
    %12 = vector.shape_cast %11 : vector<1x4x512xf32> to vector<4x512xf32>
    %c0_7 = arith.constant 0 : index
    %c0_8 = arith.constant 0 : index
    %c0_9 = arith.constant 0 : index
    %13 = vector.load %arg2[%c0_7, %c0_8, %c0_9] : memref<2x4x1xf32, #tpu.memory_space<vmem>>, vector<1x4x1xf32>
    %14 = vector.shape_cast %13 : vector<1x4x1xf32> to vector<4x1xf32>
    %15 = vector.broadcast %14 : vector<4x1xf32> to vector<4x512xf32>
    %16 = arith.subf %12, %15 : vector<4x512xf32>
    %17 = math.absf %16 : vector<4x512xf32>
    %18 = arith.addf %10, %17 : vector<4x512xf32>
    %c1 = arith.constant 1 : index
    %c0_10 = arith.constant 0 : index
    %c0_11 = arith.constant 0 : index
    %19 = vector.load %arg1[%c1, %c0_10, %c0_11] : memref<2x4x512xf32, #tpu.memory_space<vmem>>, vector<1x4x512xf32>
    %20 = vector.shape_cast %19 : vector<1x4x512xf32> to vector<4x512xf32>
    %c1_12 = arith.constant 1 : index
    %c0_13 = arith.constant 0 : index
    %c0_14 = arith.constant 0 : index
    %21 = vector.load %arg2[%c1_12, %c0_13, %c0_14] : memref<2x4x1xf32, #tpu.memory_space<vmem>>, vector<1x4x1xf32>
    %22 = vector.shape_cast %21 : vector<1x4x1xf32> to vector<4x1xf32>
    %23 = vector.broadcast %22 : vector<4x1xf32> to vector<4x512xf32>
    %24 = arith.subf %20, %23 : vector<4x512xf32>
    %25 = math.absf %24 : vector<4x512xf32>
    %26 = arith.addf %18, %25 : vector<4x512xf32>
    %27 = arith.mulf %7, %26 : vector<4x512xf32>
    %cst_15 = arith.constant dense<0.000000e+00> : vector<4xf32>
    %28 = vector.multi_reduction <add>, %27, %cst_15 [1] : vector<4x512xf32> to vector<4xf32>
    %29 = vector.shape_cast %28 : vector<4xf32> to vector<4x1xf32>
    %30 = arith.divf %29, %9 : vector<4x1xf32>
    %31 = vector.shape_cast %30 : vector<4x1xf32> to vector<1x4x1xf32>
    %cst_16 = arith.constant dense<0.000000e+00> : vector<1xf32>
    %32 = vector.multi_reduction <add>, %31, %cst_16 [1, 2] : vector<1x4x1xf32> to vector<1xf32>
    %33 = vector.shape_cast %32 : vector<1xf32> to vector<1x1x1xf32>
    %34 = vector.extract %33[0, 0, 0] : f32 from vector<1x1x1xf32>
    %c0_17 = arith.constant 0 : index
    %c0_18 = arith.constant 0 : index
    %35 = memref.load %arg3[%c0_17, %c0_18] : memref<1x1xf32, #tpu.memory_space<smem>>
    memref.store %34, %arg3[%c0_17, %c0_18] : memref<1x1xf32, #tpu.memory_space<smem>>
    return
  }
}

</mosaic_0001>

<llo_original>
// kernel: tpu_custom_call.1
$region0: #{tpu_custom_call.1}
  #allocation0 [shape = 'u32[]', space=smem, size = 0x4, offset = 0x4, fixed_abs, tag = 'smem constant byte address 0x4 - core index']
  #allocation1 [shape = 'u32[144,128]{1,0:T(1,128)}', space=vmem, size = 0x12000, scoped, tag = 'internal scratch']
  %s0 = inlined_call_operand.hbm [shape: f32[4,512], index: 0, kind: input, shape index: {}]
  %s1 = inlined_call_operand.hbm [shape: f32[2,4,512], index: 1, kind: input, shape index: {}]
  %s2 = inlined_call_operand.vmem [shape: f32[2,4,1], index: 2, kind: input, shape index: {}]
  %s3 = inlined_call_operand.hbm [shape: f32[1,1], index: 3, kind: output, shape index: {}]
  %s4 = sld [smem:[#allocation0]]
  $region30: #{tpu_custom_call.1} parent=0
    _
  %s6 = ssub.s32 1, %s4
  %s7 = scalar_select 0, %s6, %s4
  $region1: #{tpu_custom_call.1} parent=0
    #allocation2 [shape = 'u8[8192]{0}', space=vmem, size = 0x2000, scoped, tag = 'input window, operand 0, single buffered']
    #allocation3 [shape = 's32[1]{0}', space=sflag, size = 0x4, scoped, tag = 'scoped memory for tpu_custom_call.1']
    #allocation4 [shape = 's32[1]{0}', space=sflag, size = 0x4, scoped, tag = 'scoped memory for tpu_custom_call.1']
    #allocation5 [shape = 'u8[16384]{0}', space=vmem, size = 0x4000, scoped, tag = 'input window, operand 1, single buffered']
    #allocation6 [shape = 's32[1]{0}', space=sflag, size = 0x4, scoped, tag = 'scoped memory for tpu_custom_call.1']
    #allocation7 [shape = 'u8[512]{0}', space=smem, size = 0x200, scoped, tag = 'output window, operand 0, single buffered']
    %8 = vsyncpa [#allocation3], 0
    %9 = vsyncpa [#allocation6], 0
    %10 = vsyncpa [#allocation4], 0
    // Predicated region
    $region2: #{tpu_custom_call.1} parent=1 // pred_check
      _
    $region3: #{tpu_custom_call.1} parent=1 // pred_check_branch
      %12 = sbr.rel (0) target = $region5
    $region4: #{tpu_custom_call.1} parent=1 // pred_region
      %s14 = ssub.s32 256, 256
      %15 = vsyncadd [#allocation3], %s14
      %s17 = sshll.u32 [#allocation2], 4
      %s18 = int_to_ptr.vmem [resolvable:$true] %s17
      %20 = dma.hbm_to_vmem [thread:$0]  %s0, 256, %s18, [#allocation3]
    $region5: #{tpu_custom_call.1} parent=1 // pred_fallthru
      _
    // Predicated region
    $region6: #{tpu_custom_call.1} parent=1 // pred_check
      _
    $region7: #{tpu_custom_call.1} parent=1 // pred_check_branch
      %22 = sbr.rel (0) target = $region9
    $region8: #{tpu_custom_call.1} parent=1 // pred_region
      %s24 = ssub.s32 512, 512
      %25 = vsyncadd [#allocation6], %s24
      %s26 = sshll.u32 [#allocation5], 4
      %s27 = int_to_ptr.vmem [resolvable:$true] %s26
      %32 = dma.hbm_to_vmem [thread:$0]  %s1, 512, %s27, [#allocation6], 256, 256, 16
    $region9: #{tpu_custom_call.1} parent=1 // pred_fallthru
      _
    // Predicated region
    $region10: #{tpu_custom_call.1} parent=1 // pred_check
      _
    $region11: #{tpu_custom_call.1} parent=1 // pred_check_branch
      %34 = sbr.rel (0) target = $region13
    $region12: #{tpu_custom_call.1} parent=1 // pred_region
      _
    $region13: #{tpu_custom_call.1} parent=1 // pred_fallthru
      _
    // Predicated region
    $region14: #{tpu_custom_call.1} parent=1 // pred_check
      _
    $region15: #{tpu_custom_call.1} parent=1 // pred_check_branch
      %36 = sbr.rel (0) target = $region17
    $region16: #{tpu_custom_call.1} parent=1 // pred_region
      %37 = dma.done [#allocation3], 256
    $region17: #{tpu_custom_call.1} parent=1 // pred_fallthru
      _
    // Predicated region
    $region18: #{tpu_custom_call.1} parent=1 // pred_check
      _
    $region19: #{tpu_custom_call.1} parent=1 // pred_check_branch
      %39 = sbr.rel (0) target = $region21
    $region20: #{tpu_custom_call.1} parent=1 // pred_region
      %40 = dma.done [#allocation6], 512
    $region21: #{tpu_custom_call.1} parent=1 // pred_fallthru
      _
    %v41 = vld [vmem:[#allocation2] sm:$0xff]
    %v42 = vld [vmem:[#allocation2 + $0x8] sm:$0xff]
    %v43 = vxor.u32 %v41, 2147483648
    %v44 = vxor.u32 %v42, 2147483648
    %v45 = vmul.f32 %v43, 1.442695
    %v46 = vpow.pop %v45
    %v47 = vmul.f32 %v44, 1.442695
    %v48 = vpow.pop %v47
    %v49 = vadd.f32 %v46, 1.0
    %v50 = vadd.f32 %v48, 1.0
    %v51 = vrcp.pop %v49
    %v52 = vmul.f32 1.0, %v51
    %v53 = vrcp.pop %v50
    %v54 = vmul.f32 1.0, %v53
    %v55 = vadd.f32 %v52, 1e-10
    %v56 = vadd.f32 %v54, 1e-10
    %v59 = vcombine.high %v55, %v55
    %v60 = vcombine.high %v56, %v56
    %vm63 = vcmask 1043456
    %v64 = vsel %vm63, %v55, 0.0
    %v65 = vsel %vm63, %v59, 0.0
    %v66 = vadd.f32 %v64, %v65
    %v67 = vsel %vm63, %v56, 0.0
    %v68 = vadd.f32 %v66, %v67
    %v69 = vsel %vm63, %v60, 0.0
    %v70 = vadd.f32 %v68, %v69
    %71 = vadd.xlane.f32.xlu0 %v70
    %v72 = vpop.xlane.xlu0 %71
    %v73 = vld [vmem:[#allocation5] sm:$0xff]
    %v74 = vld [vmem:[#allocation5 + $0x8] sm:$0xff]
    %v75 = vld [vmem:[%s2] sm:$0xf]
    %77 = vset.pattern.permute.xlu0 0
    %78 = vperm.xlu0 %77, %v75
    %v79 = vpop.permute.xlu0 %78
    %v81 = vunpack.c.l.s4 839922192
    %v82 = vunpack.c.0.s8 %v81
    %v83 = vlaneseq
    %v84 = vshrl.u32 %v83, 7
    %v85 = vsub.s32 %v82, %v84
    %v86 = vrot.slane %v79, %v85
    %v88 = vsub.f32 %v73, %v86
    %v89 = vsub.f32 %v74, %v86
    %v90 = vand.u32 2147483647, %v88
    %v91 = vand.u32 2147483647, %v89
    %v92 = vadd.f32 %v90, 0.0
    %v93 = vadd.f32 %v91, 0.0
    %s94 = scalar_lea.vmem [#allocation5], 16
    %v95 = vld [vmem:[%s94] sm:$0xff]
    %v96 = vld [vmem:[%s94 + $0x8] sm:$0xff]
    %s97 = scalar_lea.vmem %s2, 4
    %v98 = vld [vmem:[%s97] sm:$0xf]
    %100 = vset.pattern.permute.xlu0 0
    %101 = vperm.xlu0 %100, %v98
    %v102 = vpop.permute.xlu0 %101
    %v104 = vunpack.c.l.s4 839922192
    %v105 = vunpack.c.0.s8 %v104
    %v106 = vlaneseq
    %v107 = vshrl.u32 %v106, 7
    %v108 = vsub.s32 %v105, %v107
    %v109 = vrot.slane %v102, %v108
    %v111 = vsub.f32 %v95, %v109
    %v112 = vsub.f32 %v96, %v109
    %v113 = vand.u32 2147483647, %v111
    %v114 = vand.u32 2147483647, %v112
    %v115 = vadd.f32 %v92, %v113
    %v116 = vadd.f32 %v93, %v114
    %v117 = vmul.f32 %v55, %v115
    %v118 = vmul.f32 %v56, %v116
    %v121 = vcombine.high %v117, %v117
    %v122 = vcombine.high %v118, %v118
    %v125 = vsel %vm63, %v117, 0.0
    %v126 = vsel %vm63, %v121, 0.0
    %v127 = vadd.f32 %v125, %v126
    %v128 = vsel %vm63, %v118, 0.0
    %v129 = vadd.f32 %v127, %v128
    %v130 = vsel %vm63, %v122, 0.0
    %v131 = vadd.f32 %v129, %v130
    %132 = vadd.xlane.f32.xlu0 %v131
    %v133 = vpop.xlane.xlu0 %132
    %v134 = vrcp.pop %v72
    %v135 = vmul.f32 %v133, %v134
    %vm136 = vcmask 3072
    %v137 = vsel %vm136, %v135, 0.0
    %138 = vadd.xlane.f32.xlu0 %v137
    %v139 = vpop.xlane.xlu0 %138
    %v140 = vrot.slane %v139, 4
    %v141 = vadd.f32 %v139, %v140
    %v142 = vrot.slane %v141, 2
    %v143 = vadd.f32 %v141, %v142
    %v144 = vrot.slane %v143, 1
    %v145 = vadd.f32 %v143, %v144
    %s146 = vtos %v145
    %s147 = scalar_lea.smem [#allocation7], 0
    %148 = sst [smem:[%s147]] %s146
    // Predicated region
    $region22: #{tpu_custom_call.1} parent=1 // pred_check
      _
    $region23: #{tpu_custom_call.1} parent=1 // pred_check_branch
      %150 = sbr.rel (0) target = $region25
    $region24: #{tpu_custom_call.1} parent=1 // pred_region
      %s152 = ssub.s32 16, 16
      %153 = vsyncadd [#allocation4], %s152
      %156 = dma.smem_to_hbm [#allocation7], 16, %s3, [#allocation4]
    $region25: #{tpu_custom_call.1} parent=1 // pred_fallthru
      _
    // Predicated region
    $region26: #{tpu_custom_call.1} parent=1 // pred_check
      _
    $region27: #{tpu_custom_call.1} parent=1 // pred_check_branch
      %158 = sbr.rel (0) target = $region29
    $region28: #{tpu_custom_call.1} parent=1 // pred_region
      %159 = dma.done [#allocation4], 16
    $region29: #{tpu_custom_call.1} parent=1 // pred_fallthru
      _
    %160 = sfence
    %161 = vsyncpa [#allocation3], 1
    %162 = vsyncpa [#allocation6], 1
    %163 = vsyncpa [#allocation4], 1

</llo_original>
